<compile_context>
chip_gen: v5e
topology: v5e:2x2
jax: 0.10.0
libtpu: 0.0.40
codegen_flags: <defaults>
</compile_context>

<pallas_src>
import functools

import jax
import jax.numpy as jnp
from jax.experimental import pallas as pl
from jax.experimental.pallas import tpu as pltpu

EPS = 1e-5  # nn.LayerNorm default


def _round_up(x, m):
    return (x + m - 1) // m * m


# ---------------------------------------------------------------------------
# Kernel
# ---------------------------------------------------------------------------
def _ln_relu(h, gamma, beta, true_dim):
    """LayerNorm over the last dim (true width `true_dim`) + affine + ReLU, f32.

    Padded columns of `h` are exactly 0 (weights/bias zero-padded), so the
    unmasked sums over the padded width equal sums over the true width.
    Padded gamma/beta are 0 -> padded output columns stay exactly 0.
    """
    inv_d = 1.0 / true_dim
    mu = jnp.sum(h, axis=-1, keepdims=True) * inv_d
    var = jnp.sum(h * h, axis=-1, keepdims=True) * inv_d - mu * mu
    y = (h - mu) * jax.lax.rsqrt(jnp.maximum(var, 0.0) + EPS) * gamma + beta
    return jnp.maximum(y, 0.0)


def net_ln2_kernel(x_ref, w1_ref, p1_ref, w2_ref, p2_ref, o_ref,
                   *, n_hidden, bottleneck_dim):
    x = x_ref[...]                      # bf16 (TB, F_pad)
    p1 = p1_ref[...]                    # f32 (3, H_pad): rows = b1, gamma1, beta1
    p2 = p2_ref[...]                    # f32 (3, O_pad): rows = b2, gamma2, beta2

    # fc1 (bf16 MXU, f32 accumulate) + LN1 + ReLU (f32)
    h = jnp.dot(x, w1_ref[...], preferred_element_type=jnp.float32) + p1[0:1, :]
    h = _ln_relu(h, p1[1:2, :], p1[2:3, :], n_hidden)

    # fc2 + LN2 + ReLU
    z = jnp.dot(h.astype(jnp.bfloat16), w2_ref[...],
                preferred_element_type=jnp.float32) + p2[0:1, :]
    z = _ln_relu(z, p2[1:2, :], p2[2:3, :], bottleneck_dim)

    # final x.view(x.size(0), -1) is a no-op on a 2D activation
    o_ref[...] = z.astype(o_ref.dtype)


# ---------------------------------------------------------------------------
# One-time parameter prep (hoisted out of the forward pass)
# ---------------------------------------------------------------------------
def prepare_params(params):
    """Pad/cast/pack parameters once; returns a dict to reuse across calls."""
    (w1, b1, g1, be1, w2, b2, g2, be2) = params
    n_feature, n_hidden = w1.shape
    bottleneck_dim = w2.shape[1]

    f_pad = _round_up(n_feature, 128)
    h_pad = _round_up(n_hidden, 128)
    o_pad = _round_up(bottleneck_dim, 128)

    bf16 = jnp.bfloat16
    w1p = jnp.pad(w1.astype(bf16), ((0, f_pad - n_feature), (0, h_pad - n_hidden)))
    w2p = jnp.pad(w2.astype(bf16), ((0, h_pad - n_hidden), (0, o_pad - bottleneck_dim)))

    def pack(b, g, be, width, width_pad):
        p = jnp.concatenate(
            [b.reshape(1, -1), g.reshape(1, -1), be.reshape(1, -1)], axis=0
        ).astype(jnp.float32)
        return jnp.pad(p, ((0, 0), (0, width_pad - width)))

    p1 = pack(b1, g1, be1, n_hidden, h_pad)           # (3, H_pad)
    p2 = pack(b2, g2, be2, bottleneck_dim, o_pad)     # (3, O_pad)

    return dict(
        w1p=w1p, p1=p1, w2p=w2p, p2=p2,
        n_feature=n_feature, n_hidden=n_hidden, bottleneck_dim=bottleneck_dim,
        f_pad=f_pad, h_pad=h_pad, o_pad=o_pad,
    )


# ---------------------------------------------------------------------------
# Forward wrapper
# ---------------------------------------------------------------------------
def _vmem_bytes(tb, f_pad, h_pad, o_pad, weights_double_buffered):
    wb = 2 if weights_double_buffered else 1
    x_tile = tb * f_pad * 2 * 2                       # bf16 x, double-buffered
    out_tile = tb * o_pad * 4 * 2                     # f32 out, double-buffered
    weights = (f_pad * h_pad + h_pad * o_pad) * 2 * wb
    small = (3 * h_pad + 3 * o_pad) * 4 * wb
    interm = tb * h_pad * 4 + tb * o_pad * 4          # h, z f32 temporaries
    return x_tile + out_tile + weights + small + interm


def _const_spec(shape, single_buffer):
    idx = lambda i: (0, 0)
    if single_buffer:
        try:
            return pl.BlockSpec(shape, idx, pipeline_mode=pl.Buffered(1))
        except TypeError:
            pass
    return pl.BlockSpec(shape, idx)


def _build_call(kernel, tb, b_pad, f_pad, h_pad, o_pad, out_dtype, cost,
                vmem_limit, single_buffer):
    return pl.pallas_call(
        kernel,
        out_shape=jax.ShapeDtypeStruct((b_pad, o_pad), out_dtype),
        grid=(b_pad // tb,),
        in_specs=[
            pl.BlockSpec((tb, f_pad), lambda i: (i, 0)),        # x: tiled over batch
            _const_spec((f_pad, h_pad), single_buffer),         # w1: resident
            _const_spec((3, h_pad), single_buffer),             # b1/gamma1/beta1
            _const_spec((h_pad, o_pad), single_buffer),         # w2: resident
            _const_spec((3, o_pad), single_buffer),             # b2/gamma2/beta2
        ],
        out_specs=pl.BlockSpec((tb, o_pad), lambda i: (i, 0)),
        compiler_params=pltpu.CompilerParams(
            dimension_semantics=("parallel",),                  # megacore on v7x
            vmem_limit_bytes=vmem_limit,
        ),
        cost_estimate=cost,
    )


def net_ln2_forward(x, prepped, *, tb=None):
    batch, n_feature = x.shape
    assert n_feature == prepped["n_feature"]
    n_hidden = prepped["n_hidden"]
    bottleneck_dim = prepped["bottleneck_dim"]
    f_pad, h_pad, o_pad = prepped["f_pad"], prepped["h_pad"], prepped["o_pad"]

    # --- batch tile heuristic ---------------------------------------------
    if tb is None:
        if batch <= 128:
            # bf16 vregs pack 16 sublanes -> round tiny batches to 16
            tb = _round_up(batch, 16)
        else:
            tb = min(1024, _round_up(batch, 128))
            # keep >=2 grid steps so both v7x TensorCores get work
            while tb > 128 and _round_up(batch, tb) // tb < 2:
                tb //= 2
    # shrink tile until the buffer set fits comfortably (v7x has 64 MiB VMEM)
    vmem_budget = 48 << 20
    while tb > 16 and _vmem_bytes(tb, f_pad, h_pad, o_pad, True) > vmem_budget:
        tb //= 2
    b_pad = _round_up(batch, tb)

    # --- pad only the activation (weights already prepped) -----------------
    xp = jnp.pad(x.astype(jnp.bfloat16),
                 ((0, b_pad - batch), (0, f_pad - n_feature)))

    kernel = functools.partial(net_ln2_kernel,
                               n_hidden=n_hidden, bottleneck_dim=bottleneck_dim)

    cost = pl.CostEstimate(
        flops=2 * batch * (n_feature * n_hidden + n_hidden * bottleneck_dim),
        transcendentals=2 * batch,  # one rsqrt per row per LayerNorm
        bytes_accessed=(b_pad * f_pad + f_pad * h_pad + h_pad * o_pad) * 2
        + (3 * h_pad + 3 * o_pad) * 4
        + b_pad * o_pad * x.dtype.itemsize,
    )

    needed = _vmem_bytes(tb, f_pad, h_pad, o_pad, weights_double_buffered=True)
    vmem_limit = int(min(max(int(needed * 1.5), 32 << 20), 64 << 20))

    args = (xp, prepped["w1p"], prepped["p1"], prepped["w2p"], prepped["p2"])
    try:
        out = _build_call(kernel, tb, b_pad, f_pad, h_pad, o_pad, x.dtype, cost,
                          vmem_limit, single_buffer=True)(*args)
    except Exception:
        # Fallback if pipeline_mode=pl.Buffered(1) is rejected by this backend.
        out = _build_call(kernel, tb, b_pad, f_pad, h_pad, o_pad, x.dtype, cost,
                          vmem_limit, single_buffer=False)(*args)

    # Strip the batch / lane padding.
    return out[:batch, :bottleneck_dim]


# ---------------------------------------------------------------------------
# Init + references
# ---------------------------------------------------------------------------
def init_params(key, n_feature, n_hidden, bottleneck_dim):
    k1, k1b, k2 = jax.random.split(key, 3)
    # fc1: PyTorch default Linear init: U(-1/sqrt(fan_in), 1/sqrt(fan_in))
    bound1 = 1.0 / jnp.sqrt(n_feature)
    w1 = jax.random.uniform(k1, (n_feature, n_hidden), jnp.float32, -bound1, bound1)
    b1 = jax.random.uniform(k1b, (1, n_hidden), jnp.float32, -bound1, bound1)
    g1 = jnp.ones((1, n_hidden), jnp.float32)
    be1 = jnp.zeros((1, n_hidden), jnp.float32)
    # fc2: init_weights -> xavier_normal_ weight, zero bias
    std2 = jnp.sqrt(2.0 / (n_hidden + bottleneck_dim))
    w2 = jax.random.normal(k2, (n_hidden, bottleneck_dim), jnp.float32) * std2
    b2 = jnp.zeros((1, bottleneck_dim), jnp.float32)
    g2 = jnp.ones((1, bottleneck_dim), jnp.float32)
    be2 = jnp.zeros((1, bottleneck_dim), jnp.float32)
    return (w1, b1, g1, be1, w2, b2, g2, be2)


def reference_forward_bf16(x, params):
    """Reference with the same bf16-operand / f32-accumulate matmul precision."""
    (w1, b1, g1, be1, w2, b2, g2, be2) = params

    def ln_relu(h, g, b):
        mu = jnp.mean(h, axis=-1, keepdims=True)
        var = jnp.mean((h - mu) ** 2, axis=-1, keepdims=True)
        return jnp.maximum((h - mu) / jnp.sqrt(var + EPS) * g + b, 0.0)

    h = jnp.dot(x.astype(jnp.bfloat16), w1.astype(jnp.bfloat16),
                preferred_element_type=jnp.float32) + b1
    h = ln_relu(h, g1, be1)
    z = jnp.dot(h.astype(jnp.bfloat16), w2.astype(jnp.bfloat16),
                preferred_element_type=jnp.float32) + b2
    return ln_relu(z, g2, be2)


def reference_forward_f32(x, params):
    (w1, b1, g1, be1, w2, b2, g2, be2) = params

    def ln_relu(h, g, b):
        mu = jnp.mean(h, axis=-1, keepdims=True)
        var = jnp.mean((h - mu) ** 2, axis=-1, keepdims=True)
        return jnp.maximum((h - mu) / jnp.sqrt(var + EPS) * g + b, 0.0)

    h = ln_relu(x @ w1 + b1, g1, be1)
    z = ln_relu(h @ w2 + b2, g2, be2)
    return z


if __name__ == "__main__":
    batch, n_feature, n_hidden, bottleneck_dim = 8, 32, 64, 32
    key = jax.random.PRNGKey(0)
    kx, kp = jax.random.split(key)
    x = jax.random.normal(kx, (batch, n_feature), jnp.float32)
    params = init_params(kp, n_feature, n_hidden, bottleneck_dim)

    prepped = prepare_params(params)        # one-time pad / cast / pack
    out = net_ln2_forward(x, prepped)
    out = jax.block_until_ready(out)
    assert out.shape == (batch, bottleneck_dim)

    # Tight check vs a reference using identical matmul precision.
    ref = reference_forward_bf16(x, params)
    assert jnp.allclose(out, ref, atol=1e-3, rtol=1e-3), "mismatch vs bf16 reference"
    # Loose sanity check vs the pure-f32 module semantics (bf16 MXU operands).
    ref32 = reference_forward_f32(x, params)
    assert jnp.allclose(out, ref32, atol=3e-2, rtol=3e-2), "mismatch vs f32 reference"
    print("KERNEL_OK")
</pallas_src>

<mosaic_0001>
module attributes {stable_mosaic.version = 11 : i64} {
  func.func @net_ln2_kernel(%arg0: i32, %arg1: memref<16x128xbf16, #tpu.memory_space<vmem>>, %arg2: memref<128x128xbf16, #tpu.memory_space<vmem>>, %arg3: memref<3x128xf32, #tpu.memory_space<vmem>>, %arg4: memref<128x128xbf16, #tpu.memory_space<vmem>>, %arg5: memref<3x128xf32, #tpu.memory_space<vmem>>, %arg6: memref<16x128xf32, #tpu.memory_space<vmem>>) attributes {dimension_semantics = [#tpu.dimension_semantics<parallel>], iteration_bounds = array<i64: 1>, scalar_prefetch = 0 : i64, scratch_operands = 0 : i64, tpu.core_type = #tpu.core_type<tc>, window_params = [{transform_indices = @transform_0, window_bounds = array<i64: 16, 128>}, {pipeline_mode = #tpu.pipeline_mode<synchronous>, transform_indices = @transform_1, window_bounds = array<i64: 128, 128>}, {pipeline_mode = #tpu.pipeline_mode<synchronous>, transform_indices = @transform_2, window_bounds = array<i64: 3, 128>}, {pipeline_mode = #tpu.pipeline_mode<synchronous>, transform_indices = @transform_3, window_bounds = array<i64: 128, 128>}, {pipeline_mode = #tpu.pipeline_mode<synchronous>, transform_indices = @transform_4, window_bounds = array<i64: 3, 128>}, {transform_indices = @transform_5, window_bounds = array<i64: 16, 128>}]} {
    %c0 = arith.constant 0 : index
    %c0_0 = arith.constant 0 : index
    %0 = vector.load %arg1[%c0, %c0_0] : memref<16x128xbf16, #tpu.memory_space<vmem>>, vector<16x128xbf16>
    %c0_1 = arith.constant 0 : index
    %c0_2 = arith.constant 0 : index
    %1 = vector.load %arg3[%c0_1, %c0_2] : memref<3x128xf32, #tpu.memory_space<vmem>>, vector<3x128xf32>
    %c0_3 = arith.constant 0 : index
    %c0_4 = arith.constant 0 : index
    %2 = vector.load %arg5[%c0_3, %c0_4] : memref<3x128xf32, #tpu.memory_space<vmem>>, vector<3x128xf32>
    %c0_5 = arith.constant 0 : index
    %c0_6 = arith.constant 0 : index
    %3 = vector.load %arg2[%c0_5, %c0_6] : memref<128x128xbf16, #tpu.memory_space<vmem>>, vector<128x128xbf16>
    %cst = arith.constant dense<0.000000e+00> : vector<16x128xf32>
    %4 = tpu.matmul %0, %3, %cst {dimension_numbers = #tpu.dot_dimension_numbers<[1], [0], [0], [1], [0, 0, 1, 1], [], []>} : vector<16x128xbf16>, vector<128x128xbf16>, vector<16x128xf32> -> vector<16x128xf32>
    %5 = vector.extract_strided_slice %1 {offsets = [0, 0], sizes = [1, 128], strides = [1, 1]} : vector<3x128xf32> to vector<1x128xf32>
    %6 = vector.broadcast %5 : vector<1x128xf32> to vector<16x128xf32>
    %7 = arith.addf %4, %6 : vector<16x128xf32>
    %8 = vector.extract_strided_slice %1 {offsets = [1, 0], sizes = [1, 128], strides = [1, 1]} : vector<3x128xf32> to vector<1x128xf32>
    %9 = vector.extract_strided_slice %1 {offsets = [2, 0], sizes = [1, 128], strides = [1, 1]} : vector<3x128xf32> to vector<1x128xf32>
    %cst_7 = arith.constant dense<0.000000e+00> : vector<16xf32>
    %10 = vector.multi_reduction <add>, %7, %cst_7 [1] : vector<16x128xf32> to vector<16xf32>
    %11 = vector.shape_cast %10 : vector<16xf32> to vector<16x1xf32>
    %cst_8 = arith.constant 1.562500e-02 : f32
    %12 = vector.broadcast %cst_8 : f32 to vector<16x1xf32>
    %13 = arith.mulf %11, %12 : vector<16x1xf32>
    %14 = arith.mulf %7, %7 : vector<16x128xf32>
    %cst_9 = arith.constant dense<0.000000e+00> : vector<16xf32>
    %15 = vector.multi_reduction <add>, %14, %cst_9 [1] : vector<16x128xf32> to vector<16xf32>
    %16 = vector.shape_cast %15 : vector<16xf32> to vector<16x1xf32>
    %cst_10 = arith.constant 1.562500e-02 : f32
    %17 = vector.broadcast %cst_10 : f32 to vector<16x1xf32>
    %18 = arith.mulf %16, %17 : vector<16x1xf32>
    %19 = arith.mulf %13, %13 : vector<16x1xf32>
    %20 = arith.subf %18, %19 : vector<16x1xf32>
    %21 = vector.broadcast %13 : vector<16x1xf32> to vector<16x128xf32>
    %22 = arith.subf %7, %21 : vector<16x128xf32>
    %cst_11 = arith.constant 0.000000e+00 : f32
    %23 = vector.broadcast %cst_11 : f32 to vector<16x1xf32>
    %24 = arith.maximumf %20, %23 : vector<16x1xf32>
    %cst_12 = arith.constant 9.99999974E-6 : f32
    %25 = vector.broadcast %cst_12 : f32 to vector<16x1xf32>
    %26 = arith.addf %24, %25 : vector<16x1xf32>
    %27 = math.rsqrt %26 : vector<16x1xf32>
    %28 = vector.broadcast %27 : vector<16x1xf32> to vector<16x128xf32>
    %29 = arith.mulf %22, %28 : vector<16x128xf32>
    %30 = vector.broadcast %8 : vector<1x128xf32> to vector<16x128xf32>
    %31 = arith.mulf %29, %30 : vector<16x128xf32>
    %32 = vector.broadcast %9 : vector<1x128xf32> to vector<16x128xf32>
    %33 = arith.addf %31, %32 : vector<16x128xf32>
    %cst_13 = arith.constant 0.000000e+00 : f32
    %34 = vector.broadcast %cst_13 : f32 to vector<16x128xf32>
    %35 = arith.maximumf %33, %34 : vector<16x128xf32>
    %36 = arith.truncf %35 : vector<16x128xf32> to vector<16x128xbf16>
    %c0_14 = arith.constant 0 : index
    %c0_15 = arith.constant 0 : index
    %37 = vector.load %arg4[%c0_14, %c0_15] : memref<128x128xbf16, #tpu.memory_space<vmem>>, vector<128x128xbf16>
    %cst_16 = arith.constant dense<0.000000e+00> : vector<16x128xf32>
    %38 = tpu.matmul %36, %37, %cst_16 {dimension_numbers = #tpu.dot_dimension_numbers<[1], [0], [0], [1], [0, 0, 1, 1], [], []>} : vector<16x128xbf16>, vector<128x128xbf16>, vector<16x128xf32> -> vector<16x128xf32>
    %39 = vector.extract_strided_slice %2 {offsets = [0, 0], sizes = [1, 128], strides = [1, 1]} : vector<3x128xf32> to vector<1x128xf32>
    %40 = vector.broadcast %39 : vector<1x128xf32> to vector<16x128xf32>
    %41 = arith.addf %38, %40 : vector<16x128xf32>
    %42 = vector.extract_strided_slice %2 {offsets = [1, 0], sizes = [1, 128], strides = [1, 1]} : vector<3x128xf32> to vector<1x128xf32>
    %43 = vector.extract_strided_slice %2 {offsets = [2, 0], sizes = [1, 128], strides = [1, 1]} : vector<3x128xf32> to vector<1x128xf32>
    %cst_17 = arith.constant dense<0.000000e+00> : vector<16xf32>
    %44 = vector.multi_reduction <add>, %41, %cst_17 [1] : vector<16x128xf32> to vector<16xf32>
    %45 = vector.shape_cast %44 : vector<16xf32> to vector<16x1xf32>
    %cst_18 = arith.constant 3.125000e-02 : f32
    %46 = vector.broadcast %cst_18 : f32 to vector<16x1xf32>
    %47 = arith.mulf %45, %46 : vector<16x1xf32>
    %48 = arith.mulf %41, %41 : vector<16x128xf32>
    %cst_19 = arith.constant dense<0.000000e+00> : vector<16xf32>
    %49 = vector.multi_reduction <add>, %48, %cst_19 [1] : vector<16x128xf32> to vector<16xf32>
    %50 = vector.shape_cast %49 : vector<16xf32> to vector<16x1xf32>
    %cst_20 = arith.constant 3.125000e-02 : f32
    %51 = vector.broadcast %cst_20 : f32 to vector<16x1xf32>
    %52 = arith.mulf %50, %51 : vector<16x1xf32>
    %53 = arith.mulf %47, %47 : vector<16x1xf32>
    %54 = arith.subf %52, %53 : vector<16x1xf32>
    %55 = vector.broadcast %47 : vector<16x1xf32> to vector<16x128xf32>
    %56 = arith.subf %41, %55 : vector<16x128xf32>
    %cst_21 = arith.constant 0.000000e+00 : f32
    %57 = vector.broadcast %cst_21 : f32 to vector<16x1xf32>
    %58 = arith.maximumf %54, %57 : vector<16x1xf32>
    %cst_22 = arith.constant 9.99999974E-6 : f32
    %59 = vector.broadcast %cst_22 : f32 to vector<16x1xf32>
    %60 = arith.addf %58, %59 : vector<16x1xf32>
    %61 = math.rsqrt %60 : vector<16x1xf32>
    %62 = vector.broadcast %61 : vector<16x1xf32> to vector<16x128xf32>
    %63 = arith.mulf %56, %62 : vector<16x128xf32>
    %64 = vector.broadcast %42 : vector<1x128xf32> to vector<16x128xf32>
    %65 = arith.mulf %63, %64 : vector<16x128xf32>
    %66 = vector.broadcast %43 : vector<1x128xf32> to vector<16x128xf32>
    %67 = arith.addf %65, %66 : vector<16x128xf32>
    %cst_23 = arith.constant 0.000000e+00 : f32
    %68 = vector.broadcast %cst_23 : f32 to vector<16x128xf32>
    %69 = arith.maximumf %67, %68 : vector<16x128xf32>
    %c0_24 = arith.constant 0 : index
    %c0_25 = arith.constant 0 : index
    %70 = vector.load %arg6[%c0_24, %c0_25] : memref<16x128xf32, #tpu.memory_space<vmem>>, vector<16x128xf32>
    tpu.vector_store %arg6[%c0_24, %c0_25], %69 {strides = array<i32>} : memref<16x128xf32, #tpu.memory_space<vmem>>, vector<16x128xf32>,
    return
  }
  func.func @transform_0(%arg0: i32) -> (i32, i32) {
    %c0_i32 = arith.constant 0 : i32
    %c0_i32_0 = arith.constant 0 : i32
    return %arg0, %c0_i32 : i32, i32
  }
  func.func @transform_1(%arg0: i32) -> (i32, i32) {
    %c0_i32 = arith.constant 0 : i32
    %c0_i32_0 = arith.constant 0 : i32
    %c0_i32_1 = arith.constant 0 : i32
    return %c0_i32, %c0_i32_0 : i32, i32
  }
  func.func @transform_2(%arg0: i32) -> (i32, i32) {
    %c0_i32 = arith.constant 0 : i32
    %c0_i32_0 = arith.constant 0 : i32
    %c0_i32_1 = arith.constant 0 : i32
    return %c0_i32, %c0_i32_0 : i32, i32
  }
  func.func @transform_3(%arg0: i32) -> (i32, i32) {
    %c0_i32 = arith.constant 0 : i32
    %c0_i32_0 = arith.constant 0 : i32
    %c0_i32_1 = arith.constant 0 : i32
    return %c0_i32, %c0_i32_0 : i32, i32
  }
  func.func @transform_4(%arg0: i32) -> (i32, i32) {
    %c0_i32 = arith.constant 0 : i32
    %c0_i32_0 = arith.constant 0 : i32
    %c0_i32_1 = arith.constant 0 : i32
    return %c0_i32, %c0_i32_0 : i32, i32
  }
  func.func @transform_5(%arg0: i32) -> (i32, i32) {
    %c0_i32 = arith.constant 0 : i32
    %c0_i32_0 = arith.constant 0 : i32
    return %arg0, %c0_i32 : i32, i32
  }
}

module attributes {stable_mosaic.version = 11 : i64} {
  func.func @net_ln2_kernel(%arg0: i32, %arg1: memref<16x128xbf16, #tpu.memory_space<vmem>>, %arg2: memref<128x128xbf16, #tpu.memory_space<vmem>>, %arg3: memref<3x128xf32, #tpu.memory_space<vmem>>, %arg4: memref<128x128xbf16, #tpu.memory_space<vmem>>, %arg5: memref<3x128xf32, #tpu.memory_space<vmem>>, %arg6: memref<16x128xf32, #tpu.memory_space<vmem>>) attributes {dimension_semantics = [#tpu.dimension_semantics<parallel>], iteration_bounds = array<i64: 1>, scalar_prefetch = 0 : i64, scratch_operands = 0 : i64, tpu.core_type = #tpu.core_type<tc>, window_params = [{transform_indices = @transform_0, window_bounds = array<i64: 16, 128>}, {pipeline_mode = #tpu.pipeline_mode<synchronous>, transform_indices = @transform_1, window_bounds = array<i64: 128, 128>}, {pipeline_mode = #tpu.pipeline_mode<synchronous>, transform_indices = @transform_2, window_bounds = array<i64: 3, 128>}, {pipeline_mode = #tpu.pipeline_mode<synchronous>, transform_indices = @transform_3, window_bounds = array<i64: 128, 128>}, {pipeline_mode = #tpu.pipeline_mode<synchronous>, transform_indices = @transform_4, window_bounds = array<i64: 3, 128>}, {transform_indices = @transform_5, window_bounds = array<i64: 16, 128>}]} {
    %c0 = arith.constant 0 : index
    %c0_0 = arith.constant 0 : index
    %0 = vector.load %arg1[%c0, %c0_0] : memref<16x128xbf16, #tpu.memory_space<vmem>>, vector<16x128xbf16>
    %c0_1 = arith.constant 0 : index
    %c0_2 = arith.constant 0 : index
    %1 = vector.load %arg3[%c0_1, %c0_2] : memref<3x128xf32, #tpu.memory_space<vmem>>, vector<3x128xf32>
    %c0_3 = arith.constant 0 : index
    %c0_4 = arith.constant 0 : index
    %2 = vector.load %arg5[%c0_3, %c0_4] : memref<3x128xf32, #tpu.memory_space<vmem>>, vector<3x128xf32>
    %c0_5 = arith.constant 0 : index
    %c0_6 = arith.constant 0 : index
    %3 = vector.load %arg2[%c0_5, %c0_6] : memref<128x128xbf16, #tpu.memory_space<vmem>>, vector<128x128xbf16>
    %cst = arith.constant dense<0.000000e+00> : vector<16x128xf32>
    %4 = tpu.matmul %0, %3, %cst {dimension_numbers = #tpu.dot_dimension_numbers<[1], [0], [0], [1], [0, 0, 1, 1], [], []>} : vector<16x128xbf16>, vector<128x128xbf16>, vector<16x128xf32> -> vector<16x128xf32>
    %5 = vector.extract_strided_slice %1 {offsets = [0, 0], sizes = [1, 128], strides = [1, 1]} : vector<3x128xf32> to vector<1x128xf32>
    %6 = vector.broadcast %5 : vector<1x128xf32> to vector<16x128xf32>
    %7 = arith.addf %4, %6 : vector<16x128xf32>
    %8 = vector.extract_strided_slice %1 {offsets = [1, 0], sizes = [1, 128], strides = [1, 1]} : vector<3x128xf32> to vector<1x128xf32>
    %9 = vector.extract_strided_slice %1 {offsets = [2, 0], sizes = [1, 128], strides = [1, 1]} : vector<3x128xf32> to vector<1x128xf32>
    %cst_7 = arith.constant dense<0.000000e+00> : vector<16xf32>
    %10 = vector.multi_reduction <add>, %7, %cst_7 [1] : vector<16x128xf32> to vector<16xf32>
    %11 = vector.shape_cast %10 : vector<16xf32> to vector<16x1xf32>
    %cst_8 = arith.constant 1.562500e-02 : f32
    %12 = vector.broadcast %cst_8 : f32 to vector<16x1xf32>
    %13 = arith.mulf %11, %12 : vector<16x1xf32>
    %14 = arith.mulf %7, %7 : vector<16x128xf32>
    %cst_9 = arith.constant dense<0.000000e+00> : vector<16xf32>
    %15 = vector.multi_reduction <add>, %14, %cst_9 [1] : vector<16x128xf32> to vector<16xf32>
    %16 = vector.shape_cast %15 : vector<16xf32> to vector<16x1xf32>
    %cst_10 = arith.constant 1.562500e-02 : f32
    %17 = vector.broadcast %cst_10 : f32 to vector<16x1xf32>
    %18 = arith.mulf %16, %17 : vector<16x1xf32>
    %19 = arith.mulf %13, %13 : vector<16x1xf32>
    %20 = arith.subf %18, %19 : vector<16x1xf32>
    %21 = vector.broadcast %13 : vector<16x1xf32> to vector<16x128xf32>
    %22 = arith.subf %7, %21 : vector<16x128xf32>
    %cst_11 = arith.constant 0.000000e+00 : f32
    %23 = vector.broadcast %cst_11 : f32 to vector<16x1xf32>
    %24 = arith.maximumf %20, %23 : vector<16x1xf32>
    %cst_12 = arith.constant 9.99999974E-6 : f32
    %25 = vector.broadcast %cst_12 : f32 to vector<16x1xf32>
    %26 = arith.addf %24, %25 : vector<16x1xf32>
    %27 = math.rsqrt %26 : vector<16x1xf32>
    %28 = vector.broadcast %27 : vector<16x1xf32> to vector<16x128xf32>
    %29 = arith.mulf %22, %28 : vector<16x128xf32>
    %30 = vector.broadcast %8 : vector<1x128xf32> to vector<16x128xf32>
    %31 = arith.mulf %29, %30 : vector<16x128xf32>
    %32 = vector.broadcast %9 : vector<1x128xf32> to vector<16x128xf32>
    %33 = arith.addf %31, %32 : vector<16x128xf32>
    %cst_13 = arith.constant 0.000000e+00 : f32
    %34 = vector.broadcast %cst_13 : f32 to vector<16x128xf32>
    %35 = arith.maximumf %33, %34 : vector<16x128xf32>
    %36 = arith.truncf %35 : vector<16x128xf32> to vector<16x128xbf16>
    %c0_14 = arith.constant 0 : index
    %c0_15 = arith.constant 0 : index
    %37 = vector.load %arg4[%c0_14, %c0_15] : memref<128x128xbf16, #tpu.memory_space<vmem>>, vector<128x128xbf16>
    %cst_16 = arith.constant dense<0.000000e+00> : vector<16x128xf32>
    %38 = tpu.matmul %36, %37, %cst_16 {dimension_numbers = #tpu.dot_dimension_numbers<[1], [0], [0], [1], [0, 0, 1, 1], [], []>} : vector<16x128xbf16>, vector<128x128xbf16>, vector<16x128xf32> -> vector<16x128xf32>
    %39 = vector.extract_strided_slice %2 {offsets = [0, 0], sizes = [1, 128], strides = [1, 1]} : vector<3x128xf32> to vector<1x128xf32>
    %40 = vector.broadcast %39 : vector<1x128xf32> to vector<16x128xf32>
    %41 = arith.addf %38, %40 : vector<16x128xf32>
    %42 = vector.extract_strided_slice %2 {offsets = [1, 0], sizes = [1, 128], strides = [1, 1]} : vector<3x128xf32> to vector<1x128xf32>
    %43 = vector.extract_strided_slice %2 {offsets = [2, 0], sizes = [1, 128], strides = [1, 1]} : vector<3x128xf32> to vector<1x128xf32>
    %cst_17 = arith.constant dense<0.000000e+00> : vector<16xf32>
    %44 = vector.multi_reduction <add>, %41, %cst_17 [1] : vector<16x128xf32> to vector<16xf32>
    %45 = vector.shape_cast %44 : vector<16xf32> to vector<16x1xf32>
    %cst_18 = arith.constant 3.125000e-02 : f32
    %46 = vector.broadcast %cst_18 : f32 to vector<16x1xf32>
    %47 = arith.mulf %45, %46 : vector<16x1xf32>
    %48 = arith.mulf %41, %41 : vector<16x128xf32>
    %cst_19 = arith.constant dense<0.000000e+00> : vector<16xf32>
    %49 = vector.multi_reduction <add>, %48, %cst_19 [1] : vector<16x128xf32> to vector<16xf32>
    %50 = vector.shape_cast %49 : vector<16xf32> to vector<16x1xf32>
    %cst_20 = arith.constant 3.125000e-02 : f32
    %51 = vector.broadcast %cst_20 : f32 to vector<16x1xf32>
    %52 = arith.mulf %50, %51 : vector<16x1xf32>
    %53 = arith.mulf %47, %47 : vector<16x1xf32>
    %54 = arith.subf %52, %53 : vector<16x1xf32>
    %55 = vector.broadcast %47 : vector<16x1xf32> to vector<16x128xf32>
    %56 = arith.subf %41, %55 : vector<16x128xf32>
    %cst_21 = arith.constant 0.000000e+00 : f32
    %57 = vector.broadcast %cst_21 : f32 to vector<16x1xf32>
    %58 = arith.maximumf %54, %57 : vector<16x1xf32>
    %cst_22 = arith.constant 9.99999974E-6 : f32
    %59 = vector.broadcast %cst_22 : f32 to vector<16x1xf32>
    %60 = arith.addf %58, %59 : vector<16x1xf32>
    %61 = math.rsqrt %60 : vector<16x1xf32>
    %62 = vector.broadcast %61 : vector<16x1xf32> to vector<16x128xf32>
    %63 = arith.mulf %56, %62 : vector<16x128xf32>
    %64 = vector.broadcast %42 : vector<1x128xf32> to vector<16x128xf32>
    %65 = arith.mulf %63, %64 : vector<16x128xf32>
    %66 = vector.broadcast %43 : vector<1x128xf32> to vector<16x128xf32>
    %67 = arith.addf %65, %66 : vector<16x128xf32>
    %cst_23 = arith.constant 0.000000e+00 : f32
    %68 = vector.broadcast %cst_23 : f32 to vector<16x128xf32>
    %69 = arith.maximumf %67, %68 : vector<16x128xf32>
    %c0_24 = arith.constant 0 : index
    %c0_25 = arith.constant 0 : index
    %70 = vector.load %arg6[%c0_24, %c0_25] : memref<16x128xf32, #tpu.memory_space<vmem>>, vector<16x128xf32>
    tpu.vector_store %arg6[%c0_24, %c0_25], %69 {strides = array<i32>} : memref<16x128xf32, #tpu.memory_space<vmem>>, vector<16x128xf32>,
    return
  }
  func.func @transform_0(%arg0: i32) -> (i32, i32) {
    %c0_i32 = arith.constant 0 : i32
    %c0_i32_0 = arith.constant 0 : i32
    return %arg0, %c0_i32 : i32, i32
  }
  func.func @transform_1(%arg0: i32) -> (i32, i32) {
    %c0_i32 = arith.constant 0 : i32
    %c0_i32_0 = arith.constant 0 : i32
    %c0_i32_1 = arith.constant 0 : i32
    return %c0_i32, %c0_i32_0 : i32, i32
  }
  func.func @transform_2(%arg0: i32) -> (i32, i32) {
    %c0_i32 = arith.constant 0 : i32
    %c0_i32_0 = arith.constant 0 : i32
    %c0_i32_1 = arith.constant 0 : i32
    return %c0_i32, %c0_i32_0 : i32, i32
  }
  func.func @transform_3(%arg0: i32) -> (i32, i32) {
    %c0_i32 = arith.constant 0 : i32
    %c0_i32_0 = arith.constant 0 : i32
    %c0_i32_1 = arith.constant 0 : i32
    return %c0_i32, %c0_i32_0 : i32, i32
  }
  func.func @transform_4(%arg0: i32) -> (i32, i32) {
    %c0_i32 = arith.constant 0 : i32
    %c0_i32_0 = arith.constant 0 : i32
    %c0_i32_1 = arith.constant 0 : i32
    return %c0_i32, %c0_i32_0 : i32, i32
  }
  func.func @transform_5(%arg0: i32) -> (i32, i32) {
    %c0_i32 = arith.constant 0 : i32
    %c0_i32_0 = arith.constant 0 : i32
    return %arg0, %c0_i32 : i32, i32
  }
}

</mosaic_0001>

<llo_original>
// kernel: tpu_custom_call.1
$region0: #{tpu_custom_call.1}
  #allocation0 [shape = 'u32[]', space=smem, size = 0x4, offset = 0x4, fixed_abs, tag = 'smem constant byte address 0x4 - core index']
  #allocation1 [shape = 'u32[72,128]{1,0:T(1,128)}', space=vmem, size = 0x9000, scoped, tag = 'internal scratch']
  %s0 = inlined_call_operand.hbm [shape: bf16[16,128], index: 0, kind: input, shape index: {}]
  %s1 = inlined_call_operand.hbm [shape: bf16[128,128], index: 1, kind: input, shape index: {}]
  %s2 = inlined_call_operand.hbm [shape: f32[3,128], index: 2, kind: input, shape index: {}]
  %s3 = inlined_call_operand.hbm [shape: bf16[128,128], index: 3, kind: input, shape index: {}]
  %s4 = inlined_call_operand.hbm [shape: f32[3,128], index: 4, kind: input, shape index: {}]
  %s5 = inlined_call_operand.hbm [shape: f32[16,128], index: 5, kind: output, shape index: {}]
  %s6 = sld [smem:[#allocation0]]
  $region50: #{tpu_custom_call.1} parent=0
    _
  %s8 = ssub.s32 1, %s6
  %s9 = scalar_select 0, %s8, %s6
  $region1: #{tpu_custom_call.1} parent=0
    #allocation2 [shape = 'u8[4096]{0}', space=vmem, size = 0x1000, scoped, tag = 'input window, operand 0, single buffered']
    #allocation3 [shape = 's32[1]{0}', space=sflag, size = 0x4, scoped, tag = 'scoped memory for tpu_custom_call.1']
    #allocation4 [shape = 's32[1]{0}', space=sflag, size = 0x4, scoped, tag = 'scoped memory for tpu_custom_call.1']
    #allocation5 [shape = 'u8[32768]{0}', space=vmem, size = 0x8000, scoped, tag = 'input window, operand 1, single buffered']
    #allocation6 [shape = 's32[1]{0}', space=sflag, size = 0x4, scoped, tag = 'scoped memory for tpu_custom_call.1']
    #allocation7 [shape = 'u8[2048]{0}', space=vmem, size = 0x800, scoped, tag = 'input window, operand 2, single buffered']
    #allocation8 [shape = 'u8[32768]{0}', space=vmem, size = 0x8000, scoped, tag = 'input window, operand 3, single buffered']
    #allocation9 [shape = 's32[1]{0}', space=sflag, size = 0x4, scoped, tag = 'scoped memory for tpu_custom_call.1']
    #allocation10 [shape = 'u8[2048]{0}', space=vmem, size = 0x800, scoped, tag = 'input window, operand 4, single buffered']
    #allocation11 [shape = 'u8[8192]{0}', space=vmem, size = 0x2000, scoped, tag = 'output window, operand 0, single buffered']
    %10 = vsyncpa [#allocation3], 0
    %11 = vsyncpa [#allocation6], 0
    %12 = vsyncpa [#allocation9], 0
    %13 = vsyncpa [#allocation4], 0
    // Predicated region
    $region2: #{tpu_custom_call.1} parent=1 // pred_check
      _
    $region3: #{tpu_custom_call.1} parent=1 // pred_check_branch
      %15 = sbr.rel (0) target = $region5
    $region4: #{tpu_custom_call.1} parent=1 // pred_region
      %17 = vsyncadd [#allocation3], 0
      %s18 = sshll.u32 %s0, 4
      %s19 = int_to_ptr.hbm [resolvable:$true] %s18
      %s20 = sshll.u32 [#allocation2], 4
      %s21 = int_to_ptr.vmem [resolvable:$true] %s20
      %26 = dma.hbm_to_vmem [thread:$0]  %s19, 128, %s21, [#allocation3], 64, 64, 4
    $region5: #{tpu_custom_call.1} parent=1 // pred_fallthru
      _
    // Predicated region
    $region6: #{tpu_custom_call.1} parent=1 // pred_check
      _
    $region7: #{tpu_custom_call.1} parent=1 // pred_check_branch
      %28 = sbr.rel (0) target = $region9
    $region8: #{tpu_custom_call.1} parent=1 // pred_region
      %30 = vsyncadd [#allocation6], 0
      %s31 = sshll.u32 %s1, 4
      %s32 = int_to_ptr.hbm [resolvable:$true] %s31
      %s33 = sshll.u32 [#allocation5], 4
      %s34 = int_to_ptr.vmem [resolvable:$true] %s33
      %39 = dma.hbm_to_vmem [thread:$0]  %s32, 1024, %s34, [#allocation6], 64, 64, 4
    $region9: #{tpu_custom_call.1} parent=1 // pred_fallthru
      _
    // Predicated region
    $region10: #{tpu_custom_call.1} parent=1 // pred_check
      _
    $region11: #{tpu_custom_call.1} parent=1 // pred_check_branch
      %41 = sbr.rel (0) target = $region13
    $region12: #{tpu_custom_call.1} parent=1 // pred_region
      %43 = vsyncadd [#allocation6], 0
      %s45 = sshll.u32 %s2, 4
      %s46 = int_to_ptr.hbm [resolvable:$true] %s45
      %s47 = sshll.u32 [#allocation7], 4
      %s48 = int_to_ptr.vmem [resolvable:$true] %s47
      %50 = dma.hbm_to_vmem [thread:$0]  %s46, 64, %s48, [#allocation6]
    $region13: #{tpu_custom_call.1} parent=1 // pred_fallthru
      _
    // Predicated region
    $region14: #{tpu_custom_call.1} parent=1 // pred_check
      _
    $region15: #{tpu_custom_call.1} parent=1 // pred_check_branch
      %52 = sbr.rel (0) target = $region17
    $region16: #{tpu_custom_call.1} parent=1 // pred_region
      %54 = vsyncadd [#allocation9], 0
      %s55 = sshll.u32 %s3, 4
      %s56 = int_to_ptr.hbm [resolvable:$true] %s55
      %s57 = sshll.u32 [#allocation8], 4
      %s58 = int_to_ptr.vmem [resolvable:$true] %s57
      %63 = dma.hbm_to_vmem [thread:$0]  %s56, 1024, %s58, [#allocation9], 64, 64, 4
    $region17: #{tpu_custom_call.1} parent=1 // pred_fallthru
      _
    // Predicated region
    $region18: #{tpu_custom_call.1} parent=1 // pred_check
      _
    $region19: #{tpu_custom_call.1} parent=1 // pred_check_branch
      %65 = sbr.rel (0) target = $region21
    $region20: #{tpu_custom_call.1} parent=1 // pred_region
      %67 = vsyncadd [#allocation9], 0
      %s69 = sshll.u32 %s4, 4
      %s70 = int_to_ptr.hbm [resolvable:$true] %s69
      %s71 = sshll.u32 [#allocation10], 4
      %s72 = int_to_ptr.vmem [resolvable:$true] %s71
      %74 = dma.hbm_to_vmem [thread:$0]  %s70, 64, %s72, [#allocation9]
    $region21: #{tpu_custom_call.1} parent=1 // pred_fallthru
      _
    // Predicated region
    $region22: #{tpu_custom_call.1} parent=1 // pred_check
      _
    $region23: #{tpu_custom_call.1} parent=1 // pred_check_branch
      %76 = sbr.rel (0) target = $region25
    $region24: #{tpu_custom_call.1} parent=1 // pred_region
      %78 = dma.done [#allocation3], 128
    $region25: #{tpu_custom_call.1} parent=1 // pred_fallthru
      _
    // Predicated region
    $region26: #{tpu_custom_call.1} parent=1 // pred_check
      _
    $region27: #{tpu_custom_call.1} parent=1 // pred_check_branch
      %80 = sbr.rel (0) target = $region29
    $region28: #{tpu_custom_call.1} parent=1 // pred_region
      %82 = dma.done [#allocation6], 1024
    $region29: #{tpu_custom_call.1} parent=1 // pred_fallthru
      _
    // Predicated region
    $region30: #{tpu_custom_call.1} parent=1 // pred_check
      _
    $region31: #{tpu_custom_call.1} parent=1 // pred_check_branch
      %84 = sbr.rel (0) target = $region33
    $region32: #{tpu_custom_call.1} parent=1 // pred_region
      %86 = dma.done [#allocation6], 64
    $region33: #{tpu_custom_call.1} parent=1 // pred_fallthru
      _
    // Predicated region
    $region34: #{tpu_custom_call.1} parent=1 // pred_check
      _
    $region35: #{tpu_custom_call.1} parent=1 // pred_check_branch
      %88 = sbr.rel (0) target = $region37
    $region36: #{tpu_custom_call.1} parent=1 // pred_region
      %90 = dma.done [#allocation9], 1024
    $region37: #{tpu_custom_call.1} parent=1 // pred_fallthru
      _
    // Predicated region
    $region38: #{tpu_custom_call.1} parent=1 // pred_check
      _
    $region39: #{tpu_custom_call.1} parent=1 // pred_check_branch
      %92 = sbr.rel (0) target = $region41
    $region40: #{tpu_custom_call.1} parent=1 // pred_region
      %94 = dma.done [#allocation9], 64
    $region41: #{tpu_custom_call.1} parent=1 // pred_fallthru
      _
    %v95 = vld [vmem:[#allocation2] sm:$0xf]
    %v96 = vld [vmem:[#allocation2 + $0x4] sm:$0xf]
    %v97 = vld [vmem:[#allocation7] sm:$0x7]
    %v98 = vld [vmem:[#allocation10] sm:$0x7]
    %v99 = vld [vmem:[#allocation5] sm:$0xf]
    %v100 = vld [vmem:[#allocation5 + $0x4] sm:$0xf]
    %v101 = vld [vmem:[#allocation5 + $0x8] sm:$0xf]
    %v102 = vld [vmem:[#allocation5 + $0xc] sm:$0xf]
    %v103 = vld [vmem:[#allocation5 + $0x10] sm:$0xf]
    %v104 = vld [vmem:[#allocation5 + $0x14] sm:$0xf]
    %v105 = vld [vmem:[#allocation5 + $0x18] sm:$0xf]
    %v106 = vld [vmem:[#allocation5 + $0x1c] sm:$0xf]
    %v107 = vld [vmem:[#allocation5 + $0x20] sm:$0xf]
    %v108 = vld [vmem:[#allocation5 + $0x24] sm:$0xf]
    %v109 = vld [vmem:[#allocation5 + $0x28] sm:$0xf]
    %v110 = vld [vmem:[#allocation5 + $0x2c] sm:$0xf]
    %v111 = vld [vmem:[#allocation5 + $0x30] sm:$0xf]
    %v112 = vld [vmem:[#allocation5 + $0x34] sm:$0xf]
    %v113 = vld [vmem:[#allocation5 + $0x38] sm:$0xf]
    %v114 = vld [vmem:[#allocation5 + $0x3c] sm:$0xf]
    %v115 = vperm.slane %v97, 0
    %v118 = vunpack.c.l.b16 %v95
    %v119 = vunpack.c.l.b16 %v96
    %v120 = vpack.c.b16 %v119, %v118
    %v138 = vunpack.c.l.b16 %v99
    %v139 = vunpack.c.l.b16 %v100
    %v140 = vunpack.c.l.b16 %v101
    %v141 = vunpack.c.l.b16 %v102
    %v142 = vunpack.c.l.b16 %v103
    %v143 = vunpack.c.l.b16 %v104
    %v144 = vunpack.c.l.b16 %v105
    %v145 = vunpack.c.l.b16 %v106
    %v146 = vunpack.c.l.b16 %v107
    %v147 = vunpack.c.l.b16 %v108
    %v148 = vunpack.c.l.b16 %v109
    %v149 = vunpack.c.l.b16 %v110
    %v150 = vunpack.c.l.b16 %v111
    %v151 = vunpack.c.l.b16 %v112
    %v152 = vunpack.c.l.b16 %v113
    %v153 = vunpack.c.l.b16 %v114
    %v154 = vpack.c.b16 %v139, %v138
    %v155 = vpack.c.b16 %v141, %v140
    %v156 = vpack.c.b16 %v143, %v142
    %v157 = vpack.c.b16 %v145, %v144
    %v158 = vpack.c.b16 %v147, %v146
    %v159 = vpack.c.b16 %v149, %v148
    %v160 = vpack.c.b16 %v151, %v150
    %v161 = vpack.c.b16 %v153, %v152
    %170 = vmatpush.bf16.msra.mxu0 %v161
    %171 = vmatpush.bf16.msra.mxu0 %v160
    %172 = vmatpush.bf16.msra.mxu0 %v159
    %173 = vmatpush.bf16.msra.mxu0 %v158
    %174 = vmatpush.bf16.msra.mxu0 %v157
    %175 = vmatpush.bf16.msra.mxu0 %v156
    %176 = vmatpush.bf16.msra.mxu0 %v155
    %177 = vmatpush.bf16.msra.mxu0 %v154
    %178 = vmatmul.bf16.gmra.mxu0 %v120
    %v179 = vpop.f32.mrf.mxu0
    %v180 = vadd.f32 %v115, %v179
    %v181 = vpop.f32.mrf.mxu0
    %v182 = vadd.f32 %v115, %v181
    %183 = vdwg.mxu0
    %184 = vadd.xlane.f32.xlu0 %v180
    %v185 = vpop.xlane.xlu0 %184
    %186 = vadd.xlane.f32.xlu0 %v182
    %v187 = vpop.xlane.xlu0 %186
    %v188 = vmul.f32 %v185, 0.015625
    %v189 = vmul.f32 %v187, 0.015625
    %v190 = vmul.f32 %v180, %v180
    %v191 = vmul.f32 %v182, %v182
    %192 = vadd.xlane.f32.xlu0 %v190
    %v193 = vpop.xlane.xlu0 %192
    %194 = vadd.xlane.f32.xlu0 %v191
    %v195 = vpop.xlane.xlu0 %194
    %v196 = vmul.f32 %v193, 0.015625
    %v197 = vmul.f32 %v195, 0.015625
    %v198 = vmul.f32 %v188, %v188
    %v199 = vmul.f32 %v189, %v189
    %v200 = vsub.f32 %v196, %v198
    %v201 = vsub.f32 %v197, %v199
    %v202 = vsub.f32 %v180, %v188
    %v203 = vsub.f32 %v182, %v189
    %v204 = vmax.f32 %v200, 0.0
    %v205 = vmax.f32 %v201, 0.0
    %v206 = vadd.f32 %v204, 1e-05
    %v207 = vadd.f32 %v205, 1e-05
    %v208 = vrsqrt.pop %v206
    %v209 = vmul.f32 %v208, %v206
    %v210 = vmul.f32 %v209, %v208
    %v211 = vmul.f32 0.5, %v210
    %v212 = vsub.f32 1.5, %v211
    %v213 = vmul.f32 %v208, %v212
    %vm214 = vweird.f32 %v206
    %vm215 = vweird.f32 %v208
    %vm216 = vmor %vm214, %vm215
    %v217 = vsel %vm216, %v208, %v213
    %v218 = vrsqrt.pop %v207
    %v219 = vmul.f32 %v218, %v207
    %v220 = vmul.f32 %v219, %v218
    %v221 = vmul.f32 0.5, %v220
    %v222 = vsub.f32 1.5, %v221
    %v223 = vmul.f32 %v218, %v222
    %vm224 = vweird.f32 %v207
    %vm225 = vweird.f32 %v218
    %vm226 = vmor %vm224, %vm225
    %v227 = vsel %vm226, %v218, %v223
    %v228 = vmul.f32 %v202, %v217
    %v229 = vmul.f32 %v203, %v227
    %v230 = vperm.slane %v97, 1
    %v231 = vmul.f32 %v228, %v230
    %v232 = vmul.f32 %v229, %v230
    %v233 = vperm.slane %v97, 2
    %v234 = vadd.f32 %v231, %v233
    %v235 = vadd.f32 %v232, %v233
    %v236 = vmax.f32 %v234, 0.0
    %v237 = vmax.f32 %v235, 0.0
    %v238 = vpack.c.bf16 %v237, %v236
    %v239 = vld [vmem:[#allocation8] sm:$0xf]
    %v240 = vld [vmem:[#allocation8 + $0x4] sm:$0xf]
    %v241 = vld [vmem:[#allocation8 + $0x8] sm:$0xf]
    %v242 = vld [vmem:[#allocation8 + $0xc] sm:$0xf]
    %v243 = vld [vmem:[#allocation8 + $0x10] sm:$0xf]
    %v244 = vld [vmem:[#allocation8 + $0x14] sm:$0xf]
    %v245 = vld [vmem:[#allocation8 + $0x18] sm:$0xf]
    %v246 = vld [vmem:[#allocation8 + $0x1c] sm:$0xf]
    %v247 = vld [vmem:[#allocation8 + $0x20] sm:$0xf]
    %v248 = vld [vmem:[#allocation8 + $0x24] sm:$0xf]
    %v249 = vld [vmem:[#allocation8 + $0x28] sm:$0xf]
    %v250 = vld [vmem:[#allocation8 + $0x2c] sm:$0xf]
    %v251 = vld [vmem:[#allocation8 + $0x30] sm:$0xf]
    %v252 = vld [vmem:[#allocation8 + $0x34] sm:$0xf]
    %v253 = vld [vmem:[#allocation8 + $0x38] sm:$0xf]
    %v254 = vld [vmem:[#allocation8 + $0x3c] sm:$0xf]
    %v255 = vperm.slane %v98, 0
    %v272 = vunpack.c.l.b16 %v239
    %v273 = vunpack.c.l.b16 %v240
    %v274 = vunpack.c.l.b16 %v241
    %v275 = vunpack.c.l.b16 %v242
    %v276 = vunpack.c.l.b16 %v243
    %v277 = vunpack.c.l.b16 %v244
    %v278 = vunpack.c.l.b16 %v245
    %v279 = vunpack.c.l.b16 %v246
    %v280 = vunpack.c.l.b16 %v247
    %v281 = vunpack.c.l.b16 %v248
    %v282 = vunpack.c.l.b16 %v249
    %v283 = vunpack.c.l.b16 %v250
    %v284 = vunpack.c.l.b16 %v251
    %v285 = vunpack.c.l.b16 %v252
    %v286 = vunpack.c.l.b16 %v253
    %v287 = vunpack.c.l.b16 %v254
    %v288 = vpack.c.b16 %v273, %v272
    %v289 = vpack.c.b16 %v275, %v274
    %v290 = vpack.c.b16 %v277, %v276
    %v291 = vpack.c.b16 %v279, %v278
    %v292 = vpack.c.b16 %v281, %v280
    %v293 = vpack.c.b16 %v283, %v282
    %v294 = vpack.c.b16 %v285, %v284
    %v295 = vpack.c.b16 %v287, %v286
    %304 = vmatpush.bf16.msra.mxu0 %v295
    %305 = vmatpush.bf16.msra.mxu0 %v294
    %306 = vmatpush.bf16.msra.mxu0 %v293
    %307 = vmatpush.bf16.msra.mxu0 %v292
    %308 = vmatpush.bf16.msra.mxu0 %v291
    %309 = vmatpush.bf16.msra.mxu0 %v290
    %310 = vmatpush.bf16.msra.mxu0 %v289
    %311 = vmatpush.bf16.msra.mxu0 %v288
    %312 = vmatmul.bf16.gmra.mxu0 %v238
    %v313 = vpop.f32.mrf.mxu0
    %v314 = vadd.f32 %v255, %v313
    %v315 = vpop.f32.mrf.mxu0
    %v316 = vadd.f32 %v255, %v315
    %317 = vdwg.mxu0
    %318 = vadd.xlane.f32.xlu0 %v314
    %v319 = vpop.xlane.xlu0 %318
    %320 = vadd.xlane.f32.xlu0 %v316
    %v321 = vpop.xlane.xlu0 %320
    %v322 = vmul.f32 %v319, 0.03125
    %v323 = vmul.f32 %v321, 0.03125
    %v324 = vmul.f32 %v314, %v314
    %v325 = vmul.f32 %v316, %v316
    %326 = vadd.xlane.f32.xlu0 %v324
    %v327 = vpop.xlane.xlu0 %326
    %328 = vadd.xlane.f32.xlu0 %v325
    %v329 = vpop.xlane.xlu0 %328
    %v330 = vmul.f32 %v327, 0.03125
    %v331 = vmul.f32 %v329, 0.03125
    %v332 = vmul.f32 %v322, %v322
    %v333 = vmul.f32 %v323, %v323
    %v334 = vsub.f32 %v330, %v332
    %v335 = vsub.f32 %v331, %v333
    %v336 = vsub.f32 %v314, %v322
    %v337 = vsub.f32 %v316, %v323
    %v338 = vmax.f32 %v334, 0.0
    %v339 = vmax.f32 %v335, 0.0
    %v340 = vadd.f32 %v338, 1e-05
    %v341 = vadd.f32 %v339, 1e-05
    %v342 = vrsqrt.pop %v340
    %v343 = vmul.f32 %v342, %v340
    %v344 = vmul.f32 %v343, %v342
    %v345 = vmul.f32 0.5, %v344
    %v346 = vsub.f32 1.5, %v345
    %v347 = vmul.f32 %v342, %v346
    %vm348 = vweird.f32 %v340
    %vm349 = vweird.f32 %v342
    %vm350 = vmor %vm348, %vm349
    %v351 = vsel %vm350, %v342, %v347
    %v352 = vrsqrt.pop %v341
    %v353 = vmul.f32 %v352, %v341
    %v354 = vmul.f32 %v353, %v352
    %v355 = vmul.f32 0.5, %v354
    %v356 = vsub.f32 1.5, %v355
    %v357 = vmul.f32 %v352, %v356
    %vm358 = vweird.f32 %v341
    %vm359 = vweird.f32 %v352
    %vm360 = vmor %vm358, %vm359
    %v361 = vsel %vm360, %v352, %v357
    %v362 = vmul.f32 %v336, %v351
    %v363 = vmul.f32 %v337, %v361
    %v364 = vperm.slane %v98, 1
    %v365 = vmul.f32 %v362, %v364
    %v366 = vmul.f32 %v363, %v364
    %v367 = vperm.slane %v98, 2
    %v368 = vadd.f32 %v365, %v367
    %v369 = vadd.f32 %v366, %v367
    %v370 = vmax.f32 %v368, 0.0
    %v371 = vmax.f32 %v369, 0.0
    %372 = vst [vmem:[#allocation11] sm:$0xff] %v370
    %373 = vst [vmem:[#allocation11 + $0x8] sm:$0xff] %v371
    // Predicated region
    $region42: #{tpu_custom_call.1} parent=1 // pred_check
      _
    $region43: #{tpu_custom_call.1} parent=1 // pred_check_branch
      %375 = sbr.rel (0) target = $region45
    $region44: #{tpu_custom_call.1} parent=1 // pred_region
      %377 = vsyncadd [#allocation4], 0
      %s378 = sshll.u32 [#allocation11], 4
      %s379 = int_to_ptr.vmem [resolvable:$true] %s378
      %s380 = sshll.u32 %s5, 4
      %s381 = int_to_ptr.hbm [resolvable:$true] %s380
      %386 = dma.vmem_to_hbm [thread:$0]  %s379, 256, %s381, [#allocation4], 128, 128, 8
    $region45: #{tpu_custom_call.1} parent=1 // pred_fallthru
      _
    // Predicated region
    $region46: #{tpu_custom_call.1} parent=1 // pred_check
      _
    $region47: #{tpu_custom_call.1} parent=1 // pred_check_branch
      %388 = sbr.rel (0) target = $region49
    $region48: #{tpu_custom_call.1} parent=1 // pred_region
      %390 = dma.done [#allocation4], 256
    $region49: #{tpu_custom_call.1} parent=1 // pred_fallthru
      _
    %391 = vsyncpa [#allocation3], 1
    %392 = vsyncpa [#allocation6], 1
    %393 = vsyncpa [#allocation9], 1
    %394 = vsyncpa [#allocation4], 1

// kernel: tpu_custom_call.1
$region0: #{tpu_custom_call.1}
  #allocation0 [shape = 'u32[]', space=smem, size = 0x4, offset = 0x4, fixed_abs, tag = 'smem constant byte address 0x4 - core index']
  #allocation1 [shape = 'u32[72,128]{1,0:T(1,128)}', space=vmem, size = 0x9000, scoped, tag = 'internal scratch']
  %s0 = inlined_call_operand.hbm [shape: bf16[16,128], index: 0, kind: input, shape index: {}]
  %s1 = inlined_call_operand.hbm [shape: bf16[128,128], index: 1, kind: input, shape index: {}]
  %s2 = inlined_call_operand.hbm [shape: f32[3,128], index: 2, kind: input, shape index: {}]
  %s3 = inlined_call_operand.hbm [shape: bf16[128,128], index: 3, kind: input, shape index: {}]
  %s4 = inlined_call_operand.hbm [shape: f32[3,128], index: 4, kind: input, shape index: {}]
  %s5 = inlined_call_operand.hbm [shape: f32[16,128], index: 5, kind: output, shape index: {}]
  %s6 = sld [smem:[#allocation0]]
  $region50: #{tpu_custom_call.1} parent=0
    _
  %s8 = ssub.s32 1, %s6
  %s9 = scalar_select 0, %s8, %s6
  $region1: #{tpu_custom_call.1} parent=0
    #allocation2 [shape = 'u8[4096]{0}', space=vmem, size = 0x1000, scoped, tag = 'input window, operand 0, single buffered']
    #allocation3 [shape = 's32[1]{0}', space=sflag, size = 0x4, scoped, tag = 'scoped memory for tpu_custom_call.1']
    #allocation4 [shape = 's32[1]{0}', space=sflag, size = 0x4, scoped, tag = 'scoped memory for tpu_custom_call.1']
    #allocation5 [shape = 'u8[32768]{0}', space=vmem, size = 0x8000, scoped, tag = 'input window, operand 1, single buffered']
    #allocation6 [shape = 's32[1]{0}', space=sflag, size = 0x4, scoped, tag = 'scoped memory for tpu_custom_call.1']
    #allocation7 [shape = 'u8[2048]{0}', space=vmem, size = 0x800, scoped, tag = 'input window, operand 2, single buffered']
    #allocation8 [shape = 'u8[32768]{0}', space=vmem, size = 0x8000, scoped, tag = 'input window, operand 3, single buffered']
    #allocation9 [shape = 's32[1]{0}', space=sflag, size = 0x4, scoped, tag = 'scoped memory for tpu_custom_call.1']
    #allocation10 [shape = 'u8[2048]{0}', space=vmem, size = 0x800, scoped, tag = 'input window, operand 4, single buffered']
    #allocation11 [shape = 'u8[8192]{0}', space=vmem, size = 0x2000, scoped, tag = 'output window, operand 0, single buffered']
    %10 = vsyncpa [#allocation3], 0
    %11 = vsyncpa [#allocation6], 0
    %12 = vsyncpa [#allocation9], 0
    %13 = vsyncpa [#allocation4], 0
    // Predicated region
    $region2: #{tpu_custom_call.1} parent=1 // pred_check
      _
    $region3: #{tpu_custom_call.1} parent=1 // pred_check_branch
      %15 = sbr.rel (0) target = $region5
    $region4: #{tpu_custom_call.1} parent=1 // pred_region
      %17 = vsyncadd [#allocation3], 0
      %s18 = sshll.u32 %s0, 4
      %s19 = int_to_ptr.hbm [resolvable:$true] %s18
      %s20 = sshll.u32 [#allocation2], 4
      %s21 = int_to_ptr.vmem [resolvable:$true] %s20
      %26 = dma.hbm_to_vmem [thread:$0]  %s19, 128, %s21, [#allocation3], 64, 64, 4
    $region5: #{tpu_custom_call.1} parent=1 // pred_fallthru
      _
    // Predicated region
    $region6: #{tpu_custom_call.1} parent=1 // pred_check
      _
    $region7: #{tpu_custom_call.1} parent=1 // pred_check_branch
      %28 = sbr.rel (0) target = $region9
    $region8: #{tpu_custom_call.1} parent=1 // pred_region
      %30 = vsyncadd [#allocation6], 0
      %s31 = sshll.u32 %s1, 4
      %s32 = int_to_ptr.hbm [resolvable:$true] %s31
      %s33 = sshll.u32 [#allocation5], 4
      %s34 = int_to_ptr.vmem [resolvable:$true] %s33
      %39 = dma.hbm_to_vmem [thread:$0]  %s32, 1024, %s34, [#allocation6], 64, 64, 4
    $region9: #{tpu_custom_call.1} parent=1 // pred_fallthru
      _
    // Predicated region
    $region10: #{tpu_custom_call.1} parent=1 // pred_check
      _
    $region11: #{tpu_custom_call.1} parent=1 // pred_check_branch
      %41 = sbr.rel (0) target = $region13
    $region12: #{tpu_custom_call.1} parent=1 // pred_region
      %43 = vsyncadd [#allocation6], 0
      %s45 = sshll.u32 %s2, 4
      %s46 = int_to_ptr.hbm [resolvable:$true] %s45
      %s47 = sshll.u32 [#allocation7], 4
      %s48 = int_to_ptr.vmem [resolvable:$true] %s47
      %50 = dma.hbm_to_vmem [thread:$0]  %s46, 64, %s48, [#allocation6]
    $region13: #{tpu_custom_call.1} parent=1 // pred_fallthru
      _
    // Predicated region
    $region14: #{tpu_custom_call.1} parent=1 // pred_check
      _
    $region15: #{tpu_custom_call.1} parent=1 // pred_check_branch
      %52 = sbr.rel (0) target = $region17
    $region16: #{tpu_custom_call.1} parent=1 // pred_region
      %54 = vsyncadd [#allocation9], 0
      %s55 = sshll.u32 %s3, 4
      %s56 = int_to_ptr.hbm [resolvable:$true] %s55
      %s57 = sshll.u32 [#allocation8], 4
      %s58 = int_to_ptr.vmem [resolvable:$true] %s57
      %63 = dma.hbm_to_vmem [thread:$0]  %s56, 1024, %s58, [#allocation9], 64, 64, 4
    $region17: #{tpu_custom_call.1} parent=1 // pred_fallthru
      _
    // Predicated region
    $region18: #{tpu_custom_call.1} parent=1 // pred_check
      _
    $region19: #{tpu_custom_call.1} parent=1 // pred_check_branch
      %65 = sbr.rel (0) target = $region21
    $region20: #{tpu_custom_call.1} parent=1 // pred_region
      %67 = vsyncadd [#allocation9], 0
      %s69 = sshll.u32 %s4, 4
      %s70 = int_to_ptr.hbm [resolvable:$true] %s69
      %s71 = sshll.u32 [#allocation10], 4
      %s72 = int_to_ptr.vmem [resolvable:$true] %s71
      %74 = dma.hbm_to_vmem [thread:$0]  %s70, 64, %s72, [#allocation9]
    $region21: #{tpu_custom_call.1} parent=1 // pred_fallthru
      _
    // Predicated region
    $region22: #{tpu_custom_call.1} parent=1 // pred_check
      _
    $region23: #{tpu_custom_call.1} parent=1 // pred_check_branch
      %76 = sbr.rel (0) target = $region25
    $region24: #{tpu_custom_call.1} parent=1 // pred_region
      %78 = dma.done [#allocation3], 128
    $region25: #{tpu_custom_call.1} parent=1 // pred_fallthru
      _
    // Predicated region
    $region26: #{tpu_custom_call.1} parent=1 // pred_check
      _
    $region27: #{tpu_custom_call.1} parent=1 // pred_check_branch
      %80 = sbr.rel (0) target = $region29
    $region28: #{tpu_custom_call.1} parent=1 // pred_region
      %82 = dma.done [#allocation6], 1024
    $region29: #{tpu_custom_call.1} parent=1 // pred_fallthru
      _
    // Predicated region
    $region30: #{tpu_custom_call.1} parent=1 // pred_check
      _
    $region31: #{tpu_custom_call.1} parent=1 // pred_check_branch
      %84 = sbr.rel (0) target = $region33
    $region32: #{tpu_custom_call.1} parent=1 // pred_region
      %86 = dma.done [#allocation6], 64
    $region33: #{tpu_custom_call.1} parent=1 // pred_fallthru
      _
    // Predicated region
    $region34: #{tpu_custom_call.1} parent=1 // pred_check
      _
    $region35: #{tpu_custom_call.1} parent=1 // pred_check_branch
      %88 = sbr.rel (0) target = $region37
    $region36: #{tpu_custom_call.1} parent=1 // pred_region
      %90 = dma.done [#allocation9], 1024
    $region37: #{tpu_custom_call.1} parent=1 // pred_fallthru
      _
    // Predicated region
    $region38: #{tpu_custom_call.1} parent=1 // pred_check
      _
    $region39: #{tpu_custom_call.1} parent=1 // pred_check_branch
      %92 = sbr.rel (0) target = $region41
    $region40: #{tpu_custom_call.1} parent=1 // pred_region
      %94 = dma.done [#allocation9], 64
    $region41: #{tpu_custom_call.1} parent=1 // pred_fallthru
      _
    %v95 = vld [vmem:[#allocation2] sm:$0xf]
    %v96 = vld [vmem:[#allocation2 + $0x4] sm:$0xf]
    %v97 = vld [vmem:[#allocation7] sm:$0x7]
    %v98 = vld [vmem:[#allocation10] sm:$0x7]
    %v99 = vld [vmem:[#allocation5] sm:$0xf]
    %v100 = vld [vmem:[#allocation5 + $0x4] sm:$0xf]
    %v101 = vld [vmem:[#allocation5 + $0x8] sm:$0xf]
    %v102 = vld [vmem:[#allocation5 + $0xc] sm:$0xf]
    %v103 = vld [vmem:[#allocation5 + $0x10] sm:$0xf]
    %v104 = vld [vmem:[#allocation5 + $0x14] sm:$0xf]
    %v105 = vld [vmem:[#allocation5 + $0x18] sm:$0xf]
    %v106 = vld [vmem:[#allocation5 + $0x1c] sm:$0xf]
    %v107 = vld [vmem:[#allocation5 + $0x20] sm:$0xf]
    %v108 = vld [vmem:[#allocation5 + $0x24] sm:$0xf]
    %v109 = vld [vmem:[#allocation5 + $0x28] sm:$0xf]
    %v110 = vld [vmem:[#allocation5 + $0x2c] sm:$0xf]
    %v111 = vld [vmem:[#allocation5 + $0x30] sm:$0xf]
    %v112 = vld [vmem:[#allocation5 + $0x34] sm:$0xf]
    %v113 = vld [vmem:[#allocation5 + $0x38] sm:$0xf]
    %v114 = vld [vmem:[#allocation5 + $0x3c] sm:$0xf]
    %v115 = vperm.slane %v97, 0
    %v118 = vunpack.c.l.b16 %v95
    %v119 = vunpack.c.l.b16 %v96
    %v120 = vpack.c.b16 %v119, %v118
    %v138 = vunpack.c.l.b16 %v99
    %v139 = vunpack.c.l.b16 %v100
    %v140 = vunpack.c.l.b16 %v101
    %v141 = vunpack.c.l.b16 %v102
    %v142 = vunpack.c.l.b16 %v103
    %v143 = vunpack.c.l.b16 %v104
    %v144 = vunpack.c.l.b16 %v105
    %v145 = vunpack.c.l.b16 %v106
    %v146 = vunpack.c.l.b16 %v107
    %v147 = vunpack.c.l.b16 %v108
    %v148 = vunpack.c.l.b16 %v109
    %v149 = vunpack.c.l.b16 %v110
    %v150 = vunpack.c.l.b16 %v111
    %v151 = vunpack.c.l.b16 %v112
    %v152 = vunpack.c.l.b16 %v113
    %v153 = vunpack.c.l.b16 %v114
    %v154 = vpack.c.b16 %v139, %v138
    %v155 = vpack.c.b16 %v141, %v140
    %v156 = vpack.c.b16 %v143, %v142
    %v157 = vpack.c.b16 %v145, %v144
    %v158 = vpack.c.b16 %v147, %v146
    %v159 = vpack.c.b16 %v149, %v148
    %v160 = vpack.c.b16 %v151, %v150
    %v161 = vpack.c.b16 %v153, %v152
    %170 = vmatpush.bf16.msra.mxu0 %v161
    %171 = vmatpush.bf16.msra.mxu0 %v160
    %172 = vmatpush.bf16.msra.mxu0 %v159
    %173 = vmatpush.bf16.msra.mxu0 %v158
    %174 = vmatpush.bf16.msra.mxu0 %v157
    %175 = vmatpush.bf16.msra.mxu0 %v156
    %176 = vmatpush.bf16.msra.mxu0 %v155
    %177 = vmatpush.bf16.msra.mxu0 %v154
    %178 = vmatmul.bf16.gmra.mxu0 %v120
    %v179 = vpop.f32.mrf.mxu0
    %v180 = vadd.f32 %v115, %v179
    %v181 = vpop.f32.mrf.mxu0
    %v182 = vadd.f32 %v115, %v181
    %183 = vdwg.mxu0
    %184 = vadd.xlane.f32.xlu0 %v180
    %v185 = vpop.xlane.xlu0 %184
    %186 = vadd.xlane.f32.xlu0 %v182
    %v187 = vpop.xlane.xlu0 %186
    %v188 = vmul.f32 %v185, 0.015625
    %v189 = vmul.f32 %v187, 0.015625
    %v190 = vmul.f32 %v180, %v180
    %v191 = vmul.f32 %v182, %v182
    %192 = vadd.xlane.f32.xlu0 %v190
    %v193 = vpop.xlane.xlu0 %192
    %194 = vadd.xlane.f32.xlu0 %v191
    %v195 = vpop.xlane.xlu0 %194
    %v196 = vmul.f32 %v193, 0.015625
    %v197 = vmul.f32 %v195, 0.015625
    %v198 = vmul.f32 %v188, %v188
    %v199 = vmul.f32 %v189, %v189
    %v200 = vsub.f32 %v196, %v198
    %v201 = vsub.f32 %v197, %v199
    %v202 = vsub.f32 %v180, %v188
    %v203 = vsub.f32 %v182, %v189
    %v204 = vmax.f32 %v200, 0.0
    %v205 = vmax.f32 %v201, 0.0
    %v206 = vadd.f32 %v204, 1e-05
    %v207 = vadd.f32 %v205, 1e-05
    %v208 = vrsqrt.pop %v206
    %v209 = vmul.f32 %v208, %v206
    %v210 = vmul.f32 %v209, %v208
    %v211 = vmul.f32 0.5, %v210
    %v212 = vsub.f32 1.5, %v211
    %v213 = vmul.f32 %v208, %v212
    %vm214 = vweird.f32 %v206
    %vm215 = vweird.f32 %v208
    %vm216 = vmor %vm214, %vm215
    %v217 = vsel %vm216, %v208, %v213
    %v218 = vrsqrt.pop %v207
    %v219 = vmul.f32 %v218, %v207
    %v220 = vmul.f32 %v219, %v218
    %v221 = vmul.f32 0.5, %v220
    %v222 = vsub.f32 1.5, %v221
    %v223 = vmul.f32 %v218, %v222
    %vm224 = vweird.f32 %v207
    %vm225 = vweird.f32 %v218
    %vm226 = vmor %vm224, %vm225
    %v227 = vsel %vm226, %v218, %v223
    %v228 = vmul.f32 %v202, %v217
    %v229 = vmul.f32 %v203, %v227
    %v230 = vperm.slane %v97, 1
    %v231 = vmul.f32 %v228, %v230
    %v232 = vmul.f32 %v229, %v230
    %v233 = vperm.slane %v97, 2
    %v234 = vadd.f32 %v231, %v233
    %v235 = vadd.f32 %v232, %v233
    %v236 = vmax.f32 %v234, 0.0
    %v237 = vmax.f32 %v235, 0.0
    %v238 = vpack.c.bf16 %v237, %v236
    %v239 = vld [vmem:[#allocation8] sm:$0xf]
    %v240 = vld [vmem:[#allocation8 + $0x4] sm:$0xf]
    %v241 = vld [vmem:[#allocation8 + $0x8] sm:$0xf]
    %v242 = vld [vmem:[#allocation8 + $0xc] sm:$0xf]
    %v243 = vld [vmem:[#allocation8 + $0x10] sm:$0xf]
    %v244 = vld [vmem:[#allocation8 + $0x14] sm:$0xf]
    %v245 = vld [vmem:[#allocation8 + $0x18] sm:$0xf]
    %v246 = vld [vmem:[#allocation8 + $0x1c] sm:$0xf]
    %v247 = vld [vmem:[#allocation8 + $0x20] sm:$0xf]
    %v248 = vld [vmem:[#allocation8 + $0x24] sm:$0xf]
    %v249 = vld [vmem:[#allocation8 + $0x28] sm:$0xf]
    %v250 = vld [vmem:[#allocation8 + $0x2c] sm:$0xf]
    %v251 = vld [vmem:[#allocation8 + $0x30] sm:$0xf]
    %v252 = vld [vmem:[#allocation8 + $0x34] sm:$0xf]
    %v253 = vld [vmem:[#allocation8 + $0x38] sm:$0xf]
    %v254 = vld [vmem:[#allocation8 + $0x3c] sm:$0xf]
    %v255 = vperm.slane %v98, 0
    %v272 = vunpack.c.l.b16 %v239
    %v273 = vunpack.c.l.b16 %v240
    %v274 = vunpack.c.l.b16 %v241
    %v275 = vunpack.c.l.b16 %v242
    %v276 = vunpack.c.l.b16 %v243
    %v277 = vunpack.c.l.b16 %v244
    %v278 = vunpack.c.l.b16 %v245
    %v279 = vunpack.c.l.b16 %v246
    %v280 = vunpack.c.l.b16 %v247
    %v281 = vunpack.c.l.b16 %v248
    %v282 = vunpack.c.l.b16 %v249
    %v283 = vunpack.c.l.b16 %v250
    %v284 = vunpack.c.l.b16 %v251
    %v285 = vunpack.c.l.b16 %v252
    %v286 = vunpack.c.l.b16 %v253
    %v287 = vunpack.c.l.b16 %v254
    %v288 = vpack.c.b16 %v273, %v272
    %v289 = vpack.c.b16 %v275, %v274
    %v290 = vpack.c.b16 %v277, %v276
    %v291 = vpack.c.b16 %v279, %v278
    %v292 = vpack.c.b16 %v281, %v280
    %v293 = vpack.c.b16 %v283, %v282
    %v294 = vpack.c.b16 %v285, %v284
    %v295 = vpack.c.b16 %v287, %v286
    %304 = vmatpush.bf16.msra.mxu0 %v295
    %305 = vmatpush.bf16.msra.mxu0 %v294
    %306 = vmatpush.bf16.msra.mxu0 %v293
    %307 = vmatpush.bf16.msra.mxu0 %v292
    %308 = vmatpush.bf16.msra.mxu0 %v291
    %309 = vmatpush.bf16.msra.mxu0 %v290
    %310 = vmatpush.bf16.msra.mxu0 %v289
    %311 = vmatpush.bf16.msra.mxu0 %v288
    %312 = vmatmul.bf16.gmra.mxu0 %v238
    %v313 = vpop.f32.mrf.mxu0
    %v314 = vadd.f32 %v255, %v313
    %v315 = vpop.f32.mrf.mxu0
    %v316 = vadd.f32 %v255, %v315
    %317 = vdwg.mxu0
    %318 = vadd.xlane.f32.xlu0 %v314
    %v319 = vpop.xlane.xlu0 %318
    %320 = vadd.xlane.f32.xlu0 %v316
    %v321 = vpop.xlane.xlu0 %320
    %v322 = vmul.f32 %v319, 0.03125
    %v323 = vmul.f32 %v321, 0.03125
    %v324 = vmul.f32 %v314, %v314
    %v325 = vmul.f32 %v316, %v316
    %326 = vadd.xlane.f32.xlu0 %v324
    %v327 = vpop.xlane.xlu0 %326
    %328 = vadd.xlane.f32.xlu0 %v325
    %v329 = vpop.xlane.xlu0 %328
    %v330 = vmul.f32 %v327, 0.03125
    %v331 = vmul.f32 %v329, 0.03125
    %v332 = vmul.f32 %v322, %v322
    %v333 = vmul.f32 %v323, %v323
    %v334 = vsub.f32 %v330, %v332
    %v335 = vsub.f32 %v331, %v333
    %v336 = vsub.f32 %v314, %v322
    %v337 = vsub.f32 %v316, %v323
    %v338 = vmax.f32 %v334, 0.0
    %v339 = vmax.f32 %v335, 0.0
    %v340 = vadd.f32 %v338, 1e-05
    %v341 = vadd.f32 %v339, 1e-05
    %v342 = vrsqrt.pop %v340
    %v343 = vmul.f32 %v342, %v340
    %v344 = vmul.f32 %v343, %v342
    %v345 = vmul.f32 0.5, %v344
    %v346 = vsub.f32 1.5, %v345
    %v347 = vmul.f32 %v342, %v346
    %vm348 = vweird.f32 %v340
    %vm349 = vweird.f32 %v342
    %vm350 = vmor %vm348, %vm349
    %v351 = vsel %vm350, %v342, %v347
    %v352 = vrsqrt.pop %v341
    %v353 = vmul.f32 %v352, %v341
    %v354 = vmul.f32 %v353, %v352
    %v355 = vmul.f32 0.5, %v354
    %v356 = vsub.f32 1.5, %v355
    %v357 = vmul.f32 %v352, %v356
    %vm358 = vweird.f32 %v341
    %vm359 = vweird.f32 %v352
    %vm360 = vmor %vm358, %vm359
    %v361 = vsel %vm360, %v352, %v357
    %v362 = vmul.f32 %v336, %v351
    %v363 = vmul.f32 %v337, %v361
    %v364 = vperm.slane %v98, 1
    %v365 = vmul.f32 %v362, %v364
    %v366 = vmul.f32 %v363, %v364
    %v367 = vperm.slane %v98, 2
    %v368 = vadd.f32 %v365, %v367
    %v369 = vadd.f32 %v366, %v367
    %v370 = vmax.f32 %v368, 0.0
    %v371 = vmax.f32 %v369, 0.0
    %372 = vst [vmem:[#allocation11] sm:$0xff] %v370
    %373 = vst [vmem:[#allocation11 + $0x8] sm:$0xff] %v371
    // Predicated region
    $region42: #{tpu_custom_call.1} parent=1 // pred_check
      _
    $region43: #{tpu_custom_call.1} parent=1 // pred_check_branch
      %375 = sbr.rel (0) target = $region45
    $region44: #{tpu_custom_call.1} parent=1 // pred_region
      %377 = vsyncadd [#allocation4], 0
      %s378 = sshll.u32 [#allocation11], 4
      %s379 = int_to_ptr.vmem [resolvable:$true] %s378
      %s380 = sshll.u32 %s5, 4
      %s381 = int_to_ptr.hbm [resolvable:$true] %s380
      %386 = dma.vmem_to_hbm [thread:$0]  %s379, 256, %s381, [#allocation4], 128, 128, 8
    $region45: #{tpu_custom_call.1} parent=1 // pred_fallthru
      _
    // Predicated region
    $region46: #{tpu_custom_call.1} parent=1 // pred_check
      _
    $region47: #{tpu_custom_call.1} parent=1 // pred_check_branch
      %388 = sbr.rel (0) target = $region49
    $region48: #{tpu_custom_call.1} parent=1 // pred_region
      %390 = dma.done [#allocation4], 256
    $region49: #{tpu_custom_call.1} parent=1 // pred_fallthru
      _
    %391 = vsyncpa [#allocation3], 1
    %392 = vsyncpa [#allocation6], 1
    %393 = vsyncpa [#allocation9], 1
    %394 = vsyncpa [#allocation4], 1

</llo_original>
